<compile_context>
chip_gen: v7x
topology: tpu7x:2x2x1
jax: 0.10.0
libtpu: 0.0.40
codegen_flags: <defaults>
</compile_context>

<pallas_src>
import functools

import jax
import jax.numpy as jnp
from jax import lax
from jax.experimental import pallas as pl
from jax.experimental.pallas import tpu as pltpu


def _mlp_select_kernel(x_ref, w1_ref, b1_ref, w2_ref, b2_ref, out_ref):
    """Fused: relu(x @ W1 + b1) contracted against P selected W2 rows.

    x_ref  : (tile_n, F)    bf16  streamed batch tile
    w1_ref : (F, H)         bf16  resident
    b1_ref : (1, H)         f32   resident
    w2_ref : (P, H)         f32   resident selected row(s) of W2^T
    b2_ref : (P, 1)         f32   resident selected bias(es)
    out_ref: (1, P, tile_n) f32   lane-dense output rows (batch on lanes)
    """
    # Hidden layer on the MXU (bf16 inputs, f32 accumulate), bias+ReLU on VPU.
    h = jnp.dot(x_ref[...], w1_ref[...], preferred_element_type=jnp.float32)
    h = jnp.maximum(h + b1_ref[...], 0.0)                       # (tile_n, H) f32
    # Selected output column(s): (P, H) . (tile_n, H)^T -> (P, tile_n).
    # Batch stays on lanes, so the store is an unmasked dense row.
    y = lax.dot_general(
        w2_ref[...], h,
        dimension_numbers=(((1,), (1,)), ((), ())),
        preferred_element_type=jnp.float32)
    y = y + b2_ref[...]                                          # (P, tile_n)
    out_ref[...] = y.reshape(out_ref.shape).astype(out_ref.dtype)


def _round_up(v, m):
    return (v + m - 1) // m * m


def _choose_tile_n(n, tile_n):
    base = 2048 if tile_n is None else int(tile_n)
    base = max(8, _round_up(base, 8))               # (8,128) sublane rule
    tile = min(base, _round_up(max(n, 1), 8))       # never bigger than needed
    if n >= 16:
        # Keep at least 2 grid steps so both v7x TensorCores get work.
        tile = min(tile, _round_up(pl.cdiv(n, 2), 8))
    return max(8, tile)


def _forward_selected(x, w1, b1, w2_rows, b2_rows, tile_n):
    """Core pallas_call: returns (N, P) for the P pre-selected output rows."""
    n, f = x.shape
    h_dim = w1.shape[1]
    p = w2_rows.shape[0]

    x_b = x if x.dtype == jnp.bfloat16 else x.astype(jnp.bfloat16)
    w1_b = w1.astype(jnp.bfloat16)
    b1_f = b1.astype(jnp.float32).reshape(1, h_dim)
    w2_f = w2_rows.astype(jnp.float32)
    b2_f = b2_rows.astype(jnp.float32).reshape(p, 1)

    tile = _choose_tile_n(n, tile_n)
    grid_n = pl.cdiv(n, tile)

    # VMEM budget: double-buffered x tile + output rows + resident operands.
    x_tile_bytes = tile * f * 2
    out_tile_bytes = p * tile * 4
    resident = f * h_dim * 2 + h_dim * 4 + p * h_dim * 4 + p * 4
    vmem_limit = int(min(
        64 * 1024 * 1024,                            # v7x per-TC VMEM budget
        max(8 * 1024 * 1024,
            4 * (x_tile_bytes + out_tile_bytes) + 4 * resident + (1 << 21))))

    out = pl.pallas_call(
        _mlp_select_kernel,
        out_shape=jax.ShapeDtypeStruct((grid_n, p, tile), jnp.float32),
        grid=(grid_n,),
        in_specs=[
            pl.BlockSpec((tile, f), lambda i: (i, 0)),    # x: streamed tiles
            pl.BlockSpec((f, h_dim), lambda i: (0, 0)),   # W1: resident
            pl.BlockSpec((1, h_dim), lambda i: (0, 0)),   # b1: resident
            pl.BlockSpec((p, h_dim), lambda i: (0, 0)),   # selected W2 rows
            pl.BlockSpec((p, 1), lambda i: (0, 0)),       # selected b2
        ],
        out_specs=pl.BlockSpec((1, p, tile), lambda i: (i, 0, 0)),
        compiler_params=pltpu.CompilerParams(
            dimension_semantics=("parallel",),            # shard batch across TCs
            vmem_limit_bytes=vmem_limit,
        ),
    )(x_b, w1_b, b1_f, w2_f, b2_f)

    # (grid_n, P, tile) -> (grid_n*tile, P); drop the ragged tail rows (cheap:
    # the output is only N*P floats, vs. the previous full jnp.pad copy of x).
    return out.transpose(0, 2, 1).reshape(grid_n * tile, p)[:n]


@functools.partial(jax.jit, static_argnames=("tile_n",))
def wrapped_model_forward(x, w1, b1, w2, b2, output_index, *, tile_n=None):
    """WrappedModel.forward: returns (N, 1) = model(x)[:, output_index, None].

    `output_index` may be a Python int or a traced int32; the kernel trace is
    index-independent (the index only selects the tiny W2 row outside).
    """
    h_dim = w1.shape[1]
    idx = jnp.asarray(output_index, dtype=jnp.int32)
    w2_sel = lax.dynamic_slice_in_dim(jnp.asarray(w2), idx, 1, axis=1).T      # (1, H)
    b2_2d = jnp.asarray(b2).reshape(1, -1)
    b2_sel = lax.dynamic_slice_in_dim(b2_2d, idx, 1, axis=1).reshape(1, 1)    # (1, 1)
    return _forward_selected(x, w1, jnp.asarray(b1).reshape(1, h_dim),
                             w2_sel, b2_sel, tile_n)


@functools.partial(jax.jit, static_argnames=("tile_n",))
def model_forward_all_outputs(x, w1, b1, w2, b2, *, tile_n=None):
    """All O output columns in one launch (amortizes SHAP's per-index loop)."""
    h_dim = w1.shape[1]
    return _forward_selected(x, w1, jnp.asarray(b1).reshape(1, h_dim),
                             jnp.asarray(w2).T, jnp.asarray(b2).reshape(-1, 1),
                             tile_n)


if __name__ == "__main__":
    # Small shapes consistent with a tabular multi-output regression model.
    N, F, H, O = 128, 32, 32, 4
    OUTPUT_INDEX = 2

    key = jax.random.PRNGKey(0)
    kx, k1, k2, k3, k4 = jax.random.split(key, 5)

    x = jax.random.normal(kx, (N, F), dtype=jnp.float32)
    w1 = jax.random.normal(k1, (F, H), dtype=jnp.float32) * 0.1
    b1 = jax.random.normal(k2, (1, H), dtype=jnp.float32) * 0.1
    w2 = jax.random.normal(k3, (H, O), dtype=jnp.float32) * 0.1
    b2 = jax.random.normal(k4, (1, O), dtype=jnp.float32) * 0.1

    # SHAP evaluates the same x many times -> pre-cast the streamed operand once.
    x_bf16 = x.astype(jnp.bfloat16)

    # Reference (plain JAX) using the same bf16-rounded MXU inputs, f32 math.
    xr = x_bf16.astype(jnp.float32)
    w1r = w1.astype(jnp.bfloat16).astype(jnp.float32)
    y_full = jnp.maximum(xr @ w1r + b1, 0.0) @ w2 + b2

    # Single selected output (module semantics). tile_n=64 -> 2-tile grid.
    out = wrapped_model_forward(x_bf16, w1, b1, w2, b2, OUTPUT_INDEX, tile_n=64)
    out = jax.block_until_ready(out)
    assert out.shape == (N, 1), out.shape
    assert jnp.allclose(out, y_full[:, OUTPUT_INDEX][:, None], atol=1e-2, rtol=1e-2)

    # SHAP-style loop: the compiled kernel is reused for every index.
    for oi in range(O):
        out_i = jax.block_until_ready(
            wrapped_model_forward(x_bf16, w1, b1, w2, b2, oi, tile_n=64))
        assert jnp.allclose(out_i, y_full[:, oi][:, None], atol=1e-2, rtol=1e-2)

    # Amortized path: all O columns in one launch, slice outside.
    y_all = jax.block_until_ready(
        model_forward_all_outputs(x_bf16, w1, b1, w2, b2, tile_n=64))
    assert y_all.shape == (N, O), y_all.shape
    assert jnp.allclose(y_all, y_full, atol=1e-2, rtol=1e-2)

    # Ragged batch (N not a multiple of the tile): no jnp.pad round-trip on x.
    out_r = jax.block_until_ready(
        wrapped_model_forward(x_bf16[:100], w1, b1, w2, b2, OUTPUT_INDEX, tile_n=64))
    assert out_r.shape == (100, 1), out_r.shape
    assert jnp.allclose(out_r, y_full[:100, OUTPUT_INDEX][:, None], atol=1e-2, rtol=1e-2)

    print("KERNEL_OK")
</pallas_src>

<mosaic_0001>
module attributes {stable_mosaic.version = 11 : i64} {
  func.func @_mlp_select_kernel(%arg0: i32, %arg1: memref<64x32xbf16, #tpu.memory_space<vmem>>, %arg2: memref<32x32xbf16, #tpu.memory_space<vmem>>, %arg3: memref<1x32xf32, #tpu.memory_space<vmem>>, %arg4: memref<1x32xf32, #tpu.memory_space<vmem>>, %arg5: memref<1x1xf32, #tpu.memory_space<vmem>>, %arg6: memref<1x1x64xf32, #tpu.memory_space<vmem>>) attributes {dimension_semantics = [#tpu.dimension_semantics<parallel>], iteration_bounds = array<i64: 2>, scalar_prefetch = 0 : i64, scratch_operands = 0 : i64, tpu.core_type = #tpu.core_type<tc>, window_params = [{transform_indices = @transform_0, window_bounds = array<i64: 64, 32>}, {pipeline_mode = #tpu.pipeline_mode<synchronous>, transform_indices = @transform_1, window_bounds = array<i64: 32, 32>}, {pipeline_mode = #tpu.pipeline_mode<synchronous>, transform_indices = @transform_2, window_bounds = array<i64: 1, 32>}, {pipeline_mode = #tpu.pipeline_mode<synchronous>, transform_indices = @transform_3, window_bounds = array<i64: 1, 32>}, {pipeline_mode = #tpu.pipeline_mode<synchronous>, transform_indices = @transform_4, window_bounds = array<i64: 1, 1>}, {transform_indices = @transform_5, window_bounds = array<i64: 1, 1, 64>}]} {
    %c0 = arith.constant 0 : index
    %c0_0 = arith.constant 0 : index
    %0 = vector.load %arg1[%c0, %c0_0] : memref<64x32xbf16, #tpu.memory_space<vmem>>, vector<64x32xbf16>
    %c0_1 = arith.constant 0 : index
    %c0_2 = arith.constant 0 : index
    %1 = vector.load %arg2[%c0_1, %c0_2] : memref<32x32xbf16, #tpu.memory_space<vmem>>, vector<32x32xbf16>
    %cst = arith.constant dense<0.000000e+00> : vector<64x32xf32>
    %2 = tpu.matmul %0, %1, %cst {dimension_numbers = #tpu.dot_dimension_numbers<[1], [0], [0], [1], [0, 0, 1, 1], [], []>} : vector<64x32xbf16>, vector<32x32xbf16>, vector<64x32xf32> -> vector<64x32xf32>
    %c0_3 = arith.constant 0 : index
    %c0_4 = arith.constant 0 : index
    %3 = vector.load %arg3[%c0_3, %c0_4] : memref<1x32xf32, #tpu.memory_space<vmem>>, vector<1x32xf32>
    %4 = vector.broadcast %3 : vector<1x32xf32> to vector<64x32xf32>
    %5 = arith.addf %2, %4 : vector<64x32xf32>
    %cst_5 = arith.constant 0.000000e+00 : f32
    %6 = vector.broadcast %cst_5 : f32 to vector<64x32xf32>
    %7 = arith.maximumf %5, %6 : vector<64x32xf32>
    %c0_6 = arith.constant 0 : index
    %c0_7 = arith.constant 0 : index
    %8 = vector.load %arg4[%c0_6, %c0_7] : memref<1x32xf32, #tpu.memory_space<vmem>>, vector<1x32xf32>
    %cst_8 = arith.constant dense<0.000000e+00> : vector<1x64xf32>
    %9 = tpu.matmul %8, %7, %cst_8 {dimension_numbers = #tpu.dot_dimension_numbers<[1], [1], [0], [0], [0, 0, 1, 0], [], []>} : vector<1x32xf32>, vector<64x32xf32>, vector<1x64xf32> -> vector<1x64xf32>
    %c0_9 = arith.constant 0 : index
    %c0_10 = arith.constant 0 : index
    %10 = vector.load %arg5[%c0_9, %c0_10] : memref<1x1xf32, #tpu.memory_space<vmem>>, vector<1x1xf32>
    %11 = vector.broadcast %10 : vector<1x1xf32> to vector<1x64xf32>
    %12 = arith.addf %9, %11 : vector<1x64xf32>
    %13 = vector.shape_cast %12 : vector<1x64xf32> to vector<1x1x64xf32>
    %c0_11 = arith.constant 0 : index
    %c0_12 = arith.constant 0 : index
    %c0_13 = arith.constant 0 : index
    %14 = vector.load %arg6[%c0_11, %c0_12, %c0_13] : memref<1x1x64xf32, #tpu.memory_space<vmem>>, vector<1x1x64xf32>
    tpu.vector_store %arg6[%c0_11, %c0_12, %c0_13], %13 {strides = array<i32>} : memref<1x1x64xf32, #tpu.memory_space<vmem>>, vector<1x1x64xf32>,
    return
  }
  func.func @transform_0(%arg0: i32) -> (i32, i32) {
    %c0_i32 = arith.constant 0 : i32
    %c0_i32_0 = arith.constant 0 : i32
    return %arg0, %c0_i32 : i32, i32
  }
  func.func @transform_1(%arg0: i32) -> (i32, i32) {
    %c0_i32 = arith.constant 0 : i32
    %c0_i32_0 = arith.constant 0 : i32
    %c0_i32_1 = arith.constant 0 : i32
    return %c0_i32, %c0_i32_0 : i32, i32
  }
  func.func @transform_2(%arg0: i32) -> (i32, i32) {
    %c0_i32 = arith.constant 0 : i32
    %c0_i32_0 = arith.constant 0 : i32
    %c0_i32_1 = arith.constant 0 : i32
    return %c0_i32, %c0_i32_0 : i32, i32
  }
  func.func @transform_3(%arg0: i32) -> (i32, i32) {
    %c0_i32 = arith.constant 0 : i32
    %c0_i32_0 = arith.constant 0 : i32
    %c0_i32_1 = arith.constant 0 : i32
    return %c0_i32, %c0_i32_0 : i32, i32
  }
  func.func @transform_4(%arg0: i32) -> (i32, i32) {
    %c0_i32 = arith.constant 0 : i32
    %c0_i32_0 = arith.constant 0 : i32
    %c0_i32_1 = arith.constant 0 : i32
    return %c0_i32, %c0_i32_0 : i32, i32
  }
  func.func @transform_5(%arg0: i32) -> (i32, i32, i32) {
    %c0_i32 = arith.constant 0 : i32
    %c0_i32_0 = arith.constant 0 : i32
    %c0_i32_1 = arith.constant 0 : i32
    return %arg0, %c0_i32, %c0_i32_0 : i32, i32, i32
  }
}

</mosaic_0001>

<llo_original>
// kernel: wrapped_model_forward.1
$region0: #{wrapped_model_forward.1}
  #allocation0 [shape = 'u32[]', space=smem, size = 0x4, offset = 0x4, fixed_abs, tag = 'smem constant byte address 0x4 - core index']
  #allocation1 [shape = 'u32[144,128]{1,0:T(1,128)}', space=vmem, size = 0x12000, scoped, tag = 'internal scratch']
  #allocation2 [shape = 'f32[1,1]{1,0:T(1,128)S(1)}', space=vmem, size = 0x200, scoped, tag = 'scoped memory for wrapped_model_forward.1']
  %s0 = inlined_call_operand.vmem [shape: bf16[128,32], index: 0, kind: input, shape index: {}]
  %s1 = inlined_call_operand.vmem [shape: bf16[32,32], index: 1, kind: input, shape index: {}]
  %s2 = inlined_call_operand.vmem [shape: f32[1,32], index: 2, kind: input, shape index: {}]
  %s3 = inlined_call_operand.vmem [shape: f32[1,32], index: 3, kind: input, shape index: {}]
  %s4 = inlined_call_operand.<no memory space> [shape: f32[1,1], index: 4, kind: input, shape index: {}]
  %s5 = inlined_call_operand.vmem [shape: f32[2,1,64], index: 5, kind: output, shape index: {}]
  %s6 = sld [smem:[#allocation0]]
  $region53: #{wrapped_model_forward.1} parent=0
    _
  %s8 = ssub.s32 1, %s6
  %s9 = scalar_select 0, %s8, %s6
  %v10 = vstv %s4
  %11 = vst [vmem:[#allocation2] sm:$0x1] %v10
  loop: start=0, step=1, limit=4
  $region2: #{wrapped_model_forward.1} parent=0 // loop_pre_header
    _
  $region3: #{wrapped_model_forward.1} parent=0 // loop_header
    %s13 = sphi 0, %s17
    %p14 = scmp.ge.s32.totalorder %s13, 4
    %s23 = sphi 0, %s25
    %s26 = sphi 0, %s23
    %s27 = sphi 0, %s26
    %s43 = sphi 0, %s27
    %s47 = sphi 0, %s47
    %s49 = sphi 0, %s47
    %s50 = sphi 0, %s49
    %s64 = sphi 0, %s50
    %s68 = sphi 0, %s68
    %s70 = sphi 0, %s68
    %s71 = sphi 0, %s70
    %s85 = sphi 0, %s71
    %s89 = sphi 0, %s89
    %s91 = sphi 0, %s89
    %s92 = sphi 0, %s91
    %s106 = sphi 0, %s92
    %s110 = sphi 0, %s110
    %s112 = sphi 0, %s110
    %s113 = sphi 0, %s112
    %s127 = sphi 0, %s113
    %s133 = sphi 0, %s135
    %s136 = sphi 0, %s133
    %s137 = sphi 0, %s136
    %s153 = sphi 0, %s137
  $region4: #{wrapped_model_forward.1} parent=0 // loop_header_branch
    %16 = sbr.rel (%p14) target = $region8
  $region5: #{wrapped_model_forward.1} parent=0 // loop_body
    %s18 = ssub.s32 %s13, 1
    %s19 = ssub.s32 %s13, 2
    %s20 = sadd.s32 %s13, 1
    %s21 = ssub.s32 %s13, %s20
    %p22 = scmp.eq.s32.totalorder %s21, 0
    %s24 = sadd.s32 %s23, 1
    %s25 = scalar_select %p22, %s23, %s24
    %p28 = pneg %p22
    %p29 = scmp.eq.s32.totalorder %s13, 1
    %p30 = por %p28, %p29
    %p31 = scmp.ne.s32.totalorder %s23, %s26
    %p32 = scmp.eq.s32.totalorder %s13, 0
    %p33 = por %p31, %p32
    %p34 = scmp.ne.s32.totalorder %s23, %s26
    %p35 = scmp.eq.s32.totalorder %s18, 1
    %p36 = por %p34, %p35
    %p37 = scmp.ne.s32.totalorder %s26, %s27
    %p38 = scmp.eq.s32.totalorder %s18, 0
    %p39 = por %p37, %p38
    %p40 = scmp.ne.s32.totalorder %s26, %s27
    %p41 = scmp.eq.s32.totalorder %s19, 1
    %p42 = por %p40, %p41
    %p44 = scmp.ne.s32.totalorder %s27, %s43
    %p45 = scmp.eq.s32.totalorder %s19, 0
    %p46 = por %p44, %p45
    %s48 = sadd.s32 %s47, 1
    %p51 = scmp.eq.s32.totalorder %s13, 1
    %p52 = scmp.ne.s32.totalorder %s47, %s49
    %p53 = scmp.eq.s32.totalorder %s13, 0
    %p54 = por %p52, %p53
    %p55 = scmp.ne.s32.totalorder %s47, %s49
    %p56 = scmp.eq.s32.totalorder %s18, 1
    %p57 = por %p55, %p56
    %p58 = scmp.ne.s32.totalorder %s49, %s50
    %p59 = scmp.eq.s32.totalorder %s18, 0
    %p60 = por %p58, %p59
    %p61 = scmp.ne.s32.totalorder %s49, %s50
    %p62 = scmp.eq.s32.totalorder %s19, 1
    %p63 = por %p61, %p62
    %p65 = scmp.ne.s32.totalorder %s50, %s64
    %p66 = scmp.eq.s32.totalorder %s19, 0
    %p67 = por %p65, %p66
    %s69 = sadd.s32 %s68, 1
    %p72 = scmp.eq.s32.totalorder %s13, 1
    %p73 = scmp.ne.s32.totalorder %s68, %s70
    %p74 = scmp.eq.s32.totalorder %s13, 0
    %p75 = por %p73, %p74
    %p76 = scmp.ne.s32.totalorder %s68, %s70
    %p77 = scmp.eq.s32.totalorder %s18, 1
    %p78 = por %p76, %p77
    %p79 = scmp.ne.s32.totalorder %s70, %s71
    %p80 = scmp.eq.s32.totalorder %s18, 0
    %p81 = por %p79, %p80
    %p82 = scmp.ne.s32.totalorder %s70, %s71
    %p83 = scmp.eq.s32.totalorder %s19, 1
    %p84 = por %p82, %p83
    %p86 = scmp.ne.s32.totalorder %s71, %s85
    %p87 = scmp.eq.s32.totalorder %s19, 0
    %p88 = por %p86, %p87
    %s90 = sadd.s32 %s89, 1
    %p93 = scmp.eq.s32.totalorder %s13, 1
    %p94 = scmp.ne.s32.totalorder %s89, %s91
    %p95 = scmp.eq.s32.totalorder %s13, 0
    %p96 = por %p94, %p95
    %p97 = scmp.ne.s32.totalorder %s89, %s91
    %p98 = scmp.eq.s32.totalorder %s18, 1
    %p99 = por %p97, %p98
    %p100 = scmp.ne.s32.totalorder %s91, %s92
    %p101 = scmp.eq.s32.totalorder %s18, 0
    %p102 = por %p100, %p101
    %p103 = scmp.ne.s32.totalorder %s91, %s92
    %p104 = scmp.eq.s32.totalorder %s19, 1
    %p105 = por %p103, %p104
    %p107 = scmp.ne.s32.totalorder %s92, %s106
    %p108 = scmp.eq.s32.totalorder %s19, 0
    %p109 = por %p107, %p108
    %s111 = sadd.s32 %s110, 1
    %p114 = scmp.eq.s32.totalorder %s13, 1
    %p115 = scmp.ne.s32.totalorder %s110, %s112
    %p116 = scmp.eq.s32.totalorder %s13, 0
    %p117 = por %p115, %p116
    %p118 = scmp.ne.s32.totalorder %s110, %s112
    %p119 = scmp.eq.s32.totalorder %s18, 1
    %p120 = por %p118, %p119
    %p121 = scmp.ne.s32.totalorder %s112, %s113
    %p122 = scmp.eq.s32.totalorder %s18, 0
    %p123 = por %p121, %p122
    %p124 = scmp.ne.s32.totalorder %s112, %s113
    %p125 = scmp.eq.s32.totalorder %s19, 1
    %p126 = por %p124, %p125
    %p128 = scmp.ne.s32.totalorder %s113, %s127
    %p129 = scmp.eq.s32.totalorder %s19, 0
    %p130 = por %p128, %p129
    %s131 = ssub.s32 %s13, %s20
    %p132 = scmp.eq.s32.totalorder %s131, 0
    %s134 = sadd.s32 %s133, 1
    %s135 = scalar_select %p132, %s133, %s134
    %p138 = pneg %p132
    %p139 = scmp.eq.s32.totalorder %s13, 1
    %p140 = por %p138, %p139
    %p141 = scmp.ne.s32.totalorder %s133, %s136
    %p142 = scmp.eq.s32.totalorder %s13, 0
    %p143 = por %p141, %p142
    %p144 = scmp.ne.s32.totalorder %s133, %s136
    %p145 = scmp.eq.s32.totalorder %s18, 1
    %p146 = por %p144, %p145
    %p147 = scmp.ne.s32.totalorder %s136, %s137
    %p148 = scmp.eq.s32.totalorder %s18, 0
    %p149 = por %p147, %p148
    %p150 = scmp.ne.s32.totalorder %s136, %s137
    %p151 = scmp.eq.s32.totalorder %s19, 1
    %p152 = por %p150, %p151
    %p154 = scmp.ne.s32.totalorder %s137, %s153
    %p155 = scmp.eq.s32.totalorder %s19, 0
    %p156 = por %p154, %p155
    %p157 = scmp.le.s32.totalorder 1, %s13
    %p158 = scmp.lt.s32.totalorder %s13, 3
    %p159 = pnand %p157, %p158
    %p160 = pneg %p159
    // Predicated region
    $region9: #{wrapped_model_forward.1} parent=5 // pred_check
      _
    $region10: #{wrapped_model_forward.1} parent=5 // pred_check_branch
      %162 = sbr.rel (%p159) target = $region12
    $region11: #{wrapped_model_forward.1} parent=5 // pred_region
      %s163 = ssub.s32 %s13, 1
      // Predicated region
      $region13: #{wrapped_model_forward.1} parent=11 // pred_check
        %p164 = pneg %p60
      $region14: #{wrapped_model_forward.1} parent=11 // pred_check_branch
        %166 = sbr.rel (%p164) target = $region16
      $region15: #{wrapped_model_forward.1} parent=11 // pred_region
        _
      $region16: #{wrapped_model_forward.1} parent=11 // pred_fallthru
        _
      // Predicated region
      $region17: #{wrapped_model_forward.1} parent=11 // pred_check
        %p167 = pneg %p81
      $region18: #{wrapped_model_forward.1} parent=11 // pred_check_branch
        %169 = sbr.rel (%p167) target = $region20
      $region19: #{wrapped_model_forward.1} parent=11 // pred_region
        _
      $region20: #{wrapped_model_forward.1} parent=11 // pred_fallthru
        _
      // Predicated region
      $region21: #{wrapped_model_forward.1} parent=11 // pred_check
        %p170 = pneg %p102
      $region22: #{wrapped_model_forward.1} parent=11 // pred_check_branch
        %172 = sbr.rel (%p170) target = $region24
      $region23: #{wrapped_model_forward.1} parent=11 // pred_region
        _
      $region24: #{wrapped_model_forward.1} parent=11 // pred_fallthru
        _
      // Predicated region
      $region25: #{wrapped_model_forward.1} parent=11 // pred_check
        %p173 = pneg %p123
      $region26: #{wrapped_model_forward.1} parent=11 // pred_check_branch
        %175 = sbr.rel (%p173) target = $region28
      $region27: #{wrapped_model_forward.1} parent=11 // pred_region
        _
      $region28: #{wrapped_model_forward.1} parent=11 // pred_fallthru
        _
    $region12: #{wrapped_model_forward.1} parent=5 // pred_fallthru
      _
    %p176 = scmp.lt.s32.totalorder %s13, 2
    // Predicated region
    $region29: #{wrapped_model_forward.1} parent=5 // pred_check
      %p177 = pneg %p176
    $region30: #{wrapped_model_forward.1} parent=5 // pred_check_branch
      %179 = sbr.rel (%p177) target = $region32
    $region31: #{wrapped_model_forward.1} parent=5 // pred_region
      // Predicated region
      $region33: #{wrapped_model_forward.1} parent=31 // pred_check
        %p180 = pneg %p33
      $region34: #{wrapped_model_forward.1} parent=31 // pred_check_branch
        %182 = sbr.rel (%p180) target = $region36
      $region35: #{wrapped_model_forward.1} parent=31 // pred_region
        %s183 = smul.u32 8, %s13
        %p184 = scmp.lt.s32.totalorder %s183, 15
        %s185 = scalar_select %p184, %s183, 15
        %s186 = smul.addr %s185, 4
        %s187 = scalar_lea.vmem %s0, %s186
        %s188 = smul.u32 8, %s13
      $region36: #{wrapped_model_forward.1} parent=31 // pred_fallthru
        _
    $region32: #{wrapped_model_forward.1} parent=5 // pred_fallthru
      _
    %p189 = scmp.le.s32.totalorder 1, %s13
    %p190 = scmp.lt.s32.totalorder %s13, 3
    %p191 = pnand %p189, %p190
    %p192 = pneg %p191
    // Predicated region
    $region37: #{wrapped_model_forward.1} parent=5 // pred_check
      _
    $region38: #{wrapped_model_forward.1} parent=5 // pred_check_branch
      %194 = sbr.rel (%p191) target = $region40
    $region39: #{wrapped_model_forward.1} parent=5 // pred_region
      %s195 = ssub.s32 %s13, 1
      %s196 = smul.u32 8, %s18
      %p197 = scmp.lt.s32.totalorder %s196, 15
      %s198 = scalar_select %p197, %s196, 15
      %s199 = smul.addr %s198, 4
      %s200 = scalar_lea.vmem %s0, %s199
      %p201 = pneg %p39
      %p202 = pneg %p36
      %p203 = pneg %p60
      %p204 = pneg %p57
      %p205 = pneg %p81
      %p206 = pneg %p78
      %p207 = pneg %p102
      %p208 = pneg %p99
      %p209 = pneg %p123
      %p210 = pneg %p120
      %p211 = pneg %p149
      %p212 = pneg %p146
      %p213 = scmp.lt.s32.totalorder %s18, 1
      %s214 = scalar_select %p213, %s18, 1
      %s215 = scalar_lea.vmem %s5, %s214
      %s216 = smul.u32 8, %s18
      %p217 = scmp.lt.s32.totalorder %s216, 15
      %s218 = scalar_select %p217, %s216, 15
      %s219 = smul.addr %s218, 4
      %s220 = scalar_lea.vmem %s0, %s219
      %s221 = smul.u32 8, %s18
      %p222 = scmp.lt.s32.totalorder %s18, 1
      %s223 = scalar_select %p222, %s18, 1
      %s224 = scalar_lea.vmem %s5, %s223
      %v226 = vld [vmem:[%s220] sm:$0xf]
      %v227 = vld [vmem:[%s220 + $0x4] sm:$0xf]
      %v228 = vld [vmem:[%s220 + $0x8] sm:$0xf]
      %v229 = vld [vmem:[%s220 + $0xc] sm:$0xf]
      %v230 = vld [vmem:[%s220 + $0x10] sm:$0xf]
      %v231 = vld [vmem:[%s220 + $0x14] sm:$0xf]
      %v232 = vld [vmem:[%s220 + $0x18] sm:$0xf]
      %v233 = vld [vmem:[%s220 + $0x1c] sm:$0xf]
      %v234 = vld [vmem:[%s1] sm:$0xf]
      %v235 = vld [vmem:[%s1 + $0x4] sm:$0xf]
      %v236 = vld [vmem:[%s1 + $0x8] sm:$0xf]
      %v237 = vld [vmem:[%s1 + $0xc] sm:$0xf]
      %v238 = vld [vmem:[%s2] sm:$0x1]
      %v240 = vlaneseq
      %v241 = vshrl.u32 %v240, 7
      %v242 = vsub.s32 0, %v241
      %v243 = vrot.slane %v238, %v242
      %v253 = vunpack.c.l.b16 %v226
      %v254 = vunpack.c.l.b16 %v227
      %v255 = vunpack.c.l.b16 %v228
      %v256 = vunpack.c.l.b16 %v229
      %v257 = vunpack.c.l.b16 %v230
      %v258 = vunpack.c.l.b16 %v231
      %v259 = vunpack.c.l.b16 %v232
      %v260 = vunpack.c.l.b16 %v233
      %v261 = vpack.c.b16 %v254, %v253
      %v262 = vpack.c.b16 %v256, %v255
      %v263 = vpack.c.b16 %v258, %v257
      %v264 = vpack.c.b16 %v260, %v259
      %v269 = vunpack.c.l.b16 %v234
      %v270 = vunpack.c.l.b16 %v235
      %v271 = vunpack.c.l.b16 %v236
      %v272 = vunpack.c.l.b16 %v237
      %v273 = vpack.c.b16 %v270, %v269
      %v274 = vpack.c.b16 %v272, %v271
      %vm277 = vcmask 261120
      %v279 = vsel %vm277, %v261, 0
      %v282 = vsel %vm277, %v262, 0
      %v285 = vsel %vm277, %v263, 0
      %v288 = vsel %vm277, %v264, 0
      %290 = vmatprep.subr.bf16.mxu0 0
      %291 = vmatpush1.bf16.msra.mxu0 %v273
      %292 = vmatprep.subr.bf16.mxu0 0
      %293 = vmatpush1.bf16.msra.mxu0 %v274
      %294 = vmatprep.subr.bf16.mxu0 0
      %295 = vmatpush1.bf16.msra.mxu0 0
      %296 = vmatprep.subr.bf16.mxu0 0
      %297 = vmatpush1.bf16.msra.mxu0 0
      %298 = vmatprep.subr.bf16.mxu0 0
      %299 = vmatpush1.bf16.msra.mxu0 0
      %300 = vmatprep.subr.bf16.mxu0 0
      %301 = vmatpush1.bf16.msra.mxu0 0
      %302 = vmatprep.subr.bf16.mxu0 0
      %303 = vmatpush1.bf16.msra.mxu0 0
      %304 = vmatprep.subr.bf16.mxu0 0
      %305 = vmatpush1.bf16.msra.mxu0 0
      %306 = vmatprep.subr.bf16.mxu0 0
      %307 = vmatpush1.bf16.msra.mxu0 0
      %308 = vmatprep.subr.bf16.mxu0 0
      %309 = vmatpush1.bf16.msra.mxu0 0
      %310 = vmatprep.subr.bf16.mxu0 0
      %311 = vmatpush1.bf16.msra.mxu0 0
      %312 = vmatprep.subr.bf16.mxu0 0
      %313 = vmatpush1.bf16.msra.mxu0 0
      %314 = vmatprep.subr.bf16.mxu0 0
      %315 = vmatpush1.bf16.msra.mxu0 0
      %316 = vmatprep.subr.bf16.mxu0 0
      %317 = vmatpush1.bf16.msra.mxu0 0
      %318 = vmatprep.subr.bf16.mxu0 0
      %319 = vmatpush1.bf16.msra.mxu0 0
      %320 = vmatprep.subr.bf16.mxu0 0
      %321 = vmatpush1.bf16.msra.mxu0 0
      %322 = vmatprep.mubr.bf16.mxu0 0
      %323 = vmatmul.mubr.bf16.gmra.mrb[0].mxu0 %v279
      %v324 = vpop.f32.mrb[0].mxu0
      %v325 = vadd.f32 %v243, %v324
      %v326 = vpop.f32.mrb[0].mxu0
      %v327 = vpop.f32.mrb[0].mxu0
      %v328 = vadd.f32 %v243, %v327
      %v329 = vpop.f32.mrb[0].mxu0
      %330 = vmatprep.mubr.bf16.mxu0 0
      %331 = vmatmul.mubr.bf16.gmra.mrb[0].mxu0 %v282
      %v332 = vpop.f32.mrb[0].mxu0
      %v333 = vadd.f32 %v243, %v332
      %v334 = vpop.f32.mrb[0].mxu0
      %v335 = vpop.f32.mrb[0].mxu0
      %v336 = vadd.f32 %v243, %v335
      %v337 = vpop.f32.mrb[0].mxu0
      %338 = vmatprep.mubr.bf16.mxu0 0
      %339 = vmatmul.mubr.bf16.gmra.mrb[0].mxu0 %v285
      %v340 = vpop.f32.mrb[0].mxu0
      %v341 = vadd.f32 %v243, %v340
      %v342 = vpop.f32.mrb[0].mxu0
      %v343 = vpop.f32.mrb[0].mxu0
      %v344 = vadd.f32 %v243, %v343
      %v345 = vpop.f32.mrb[0].mxu0
      %346 = vmatprep.mubr.bf16.mxu0 0
      %347 = vmatmul.mubr.bf16.gmra.mrb[0].mxu0 %v288
      %v348 = vpop.f32.mrb[0].mxu0
      %v349 = vadd.f32 %v243, %v348
      %v350 = vpop.f32.mrb[0].mxu0
      %v351 = vpop.f32.mrb[0].mxu0
      %v352 = vadd.f32 %v243, %v351
      %v353 = vpop.f32.mrb[0].mxu0
      %354 = vdwg.mxu0
      %v355 = vmax.f32 %v325, 0.0
      %v356 = vmax.f32 %v328, 0.0
      %v357 = vmax.f32 %v333, 0.0
      %v358 = vmax.f32 %v336, 0.0
      %v359 = vmax.f32 %v341, 0.0
      %v360 = vmax.f32 %v344, 0.0
      %v361 = vmax.f32 %v349, 0.0
      %v362 = vmax.f32 %v352, 0.0
      %v363 = vld [vmem:[%s3] sm:$0x1]
      %v364 = vld [vmem:[#allocation2] sm:$0x1]
      %366 = vset.pattern.permute.xlu0 0
      %367 = vperm.xlu0 %366, %v364
      %v368 = vpop.permute.xlu0 %367
      %v370 = vlaneseq
      %v371 = vshrl.u32 %v370, 7
      %v372 = vsub.s32 0, %v371
      %v373 = vrot.slane %v368, %v372
      %v375 = vsel %vm277, %v363, 0
      %v378 = vsel %vm277, %v355, 0
      %v381 = vsel %vm277, %v356, 0
      %v384 = vsel %vm277, %v357, 0
      %v387 = vsel %vm277, %v358, 0
      %v390 = vsel %vm277, %v359, 0
      %v393 = vsel %vm277, %v360, 0
      %v396 = vsel %vm277, %v361, 0
      %v399 = vsel %vm277, %v362, 0
      %401 = vmatprep.subr.mxu0 0.0
      %402 = vmatpush1.xpose.msra.mxu0 %v378
      %403 = vmatprep.subr.mxu0 0.0
      %404 = vmatpush1.xpose.msra.mxu0 %v381
      %405 = vmatprep.subr.mxu0 0.0
      %406 = vmatpush1.xpose.msra.mxu0 %v384
      %407 = vmatprep.subr.mxu0 0.0
      %408 = vmatpush1.xpose.msra.mxu0 %v387
      %409 = vmatprep.subr.mxu0 0.0
      %410 = vmatpush1.xpose.msra.mxu0 %v390
      %411 = vmatprep.subr.mxu0 0.0
      %412 = vmatpush1.xpose.msra.mxu0 %v393
      %413 = vmatprep.subr.mxu0 0.0
      %414 = vmatpush1.xpose.msra.mxu0 %v396
      %415 = vmatprep.subr.mxu0 0.0
      %416 = vmatpush1.xpose.msra.mxu0 %v399
      %417 = vmatprep.subr.mxu0 0.0
      %418 = vmatpush1.xpose.msra.mxu0 0.0
      %419 = vmatprep.subr.mxu0 0.0
      %420 = vmatpush1.xpose.msra.mxu0 0.0
      %421 = vmatprep.subr.mxu0 0.0
      %422 = vmatpush1.xpose.msra.mxu0 0.0
      %423 = vmatprep.subr.mxu0 0.0
      %424 = vmatpush1.xpose.msra.mxu0 0.0
      %425 = vmatprep.subr.mxu0 0.0
      %426 = vmatpush1.xpose.msra.mxu0 0.0
      %427 = vmatprep.subr.mxu0 0.0
      %428 = vmatpush1.xpose.msra.mxu0 0.0
      %429 = vmatprep.subr.mxu0 0.0
      %430 = vmatpush1.xpose.msra.mxu0 0.0
      %431 = vmatprep.subr.mxu0 0.0
      %432 = vmatpush1.xpose.msra.mxu0 0.0
      %433 = vmatprep.subr.mxu0 0.0
      %434 = vmatpush1.xpose.msra.mxu0 0.0
      %435 = vmatprep.subr.mxu0 0.0
      %436 = vmatpush1.xpose.msra.mxu0 0.0
      %437 = vmatprep.subr.mxu0 0.0
      %438 = vmatpush1.xpose.msra.mxu0 0.0
      %439 = vmatprep.subr.mxu0 0.0
      %440 = vmatpush1.xpose.msra.mxu0 0.0
      %441 = vmatprep.subr.mxu0 0.0
      %442 = vmatpush1.xpose.msra.mxu0 0.0
      %443 = vmatprep.subr.mxu0 0.0
      %444 = vmatpush1.xpose.msra.mxu0 0.0
      %445 = vmatprep.subr.mxu0 0.0
      %446 = vmatpush1.xpose.msra.mxu0 0.0
      %447 = vmatprep.subr.mxu0 0.0
      %448 = vmatpush1.xpose.msra.mxu0 0.0
      %449 = vmatprep.subr.mxu0 0.0
      %450 = vmatpush1.xpose.msra.mxu0 0.0
      %451 = vmatprep.subr.mxu0 0.0
      %452 = vmatpush1.xpose.msra.mxu0 0.0
      %453 = vmatprep.subr.mxu0 0.0
      %454 = vmatpush1.xpose.msra.mxu0 0.0
      %455 = vmatprep.subr.mxu0 0.0
      %456 = vmatpush1.xpose.msra.mxu0 0.0
      %457 = vmatprep.subr.mxu0 0.0
      %458 = vmatpush1.xpose.msra.mxu0 0.0
      %459 = vmatprep.subr.mxu0 0.0
      %460 = vmatpush1.xpose.msra.mxu0 0.0
      %461 = vmatprep.subr.mxu0 0.0
      %462 = vmatpush1.xpose.msra.mxu0 0.0
      %463 = vmatprep.subr.mxu0 0.0
      %464 = vmatpush1.xpose.msra.mxu0 0.0
      %465 = vmatprep.mubr.f32.mxu0 0.0
      %466 = vmatmul.mubr.f32.gmra.mrb[0].mxu0 %v375
      %v467 = vpop.f32.mrb[0].mxu0
      %v468 = vadd.f32 %v373, %v467
      %v469 = vpop.f32.mrb[0].mxu0
      %470 = vdwg.mxu0
      %vm471 = vcmask 516096
      %472 = vst.msk [vmem:[%s224] sm:$0x1] %vm471, %v468
      %p473 = scmp.lt.s32.totalorder %s18, 1
      %s474 = scalar_select %p473, %s18, 1
      %s475 = scalar_lea.vmem %s5, %s474
      // Predicated region
      $region41: #{wrapped_model_forward.1} parent=39 // pred_check
        %p476 = pneg %p146
      $region42: #{wrapped_model_forward.1} parent=39 // pred_check_branch
        %478 = sbr.rel (%p476) target = $region44
      $region43: #{wrapped_model_forward.1} parent=39 // pred_region
        _
      $region44: #{wrapped_model_forward.1} parent=39 // pred_fallthru
        _
    $region40: #{wrapped_model_forward.1} parent=5 // pred_fallthru
      _
    %p479 = scmp.le.s32.totalorder 2, %s13
    // Predicated region
    $region45: #{wrapped_model_forward.1} parent=5 // pred_check
      %p480 = pneg %p479
    $region46: #{wrapped_model_forward.1} parent=5 // pred_check_branch
      %482 = sbr.rel (%p480) target = $region48
    $region47: #{wrapped_model_forward.1} parent=5 // pred_region
      %s483 = ssub.s32 %s13, 2
      // Predicated region
      $region49: #{wrapped_model_forward.1} parent=47 // pred_check
        %p484 = pneg %p152
      $region50: #{wrapped_model_forward.1} parent=47 // pred_check_branch
        %486 = sbr.rel (%p484) target = $region52
      $region51: #{wrapped_model_forward.1} parent=47 // pred_region
        %p487 = scmp.lt.s32.totalorder %s19, 1
        %s488 = scalar_select %p487, %s19, 1
        %s489 = scalar_lea.vmem %s5, %s488
      $region52: #{wrapped_model_forward.1} parent=47 // pred_fallthru
        _
    $region48: #{wrapped_model_forward.1} parent=5 // pred_fallthru
      _
  $region6: #{wrapped_model_forward.1} parent=0 // loop_footer
    %s17 = sadd.s32 1, %s13
  $region7: #{wrapped_model_forward.1} parent=0 // loop_footer_branch
    %12 = sbr.rel target = $region3
  $region8: #{wrapped_model_forward.1} parent=0 // loop_exit
    _

</llo_original>
